<compile_context>
chip_gen: v5e
topology: v5e:2x2
jax: 0.10.0
libtpu: 0.0.40
codegen_flags: <defaults>
</compile_context>

<pallas_src>
import functools

import jax
import jax.numpy as jnp
import numpy as np
from jax import lax
from jax.experimental import pallas as pl
from jax.experimental.pallas import tpu as pltpu


def _round_up(x, m):
    return ((x + m - 1) // m) * m


def _cdiv(a, b):
    return -(-a // b)


def _padded_vmem_bytes(rows, cols, itemsize):
    # Conservative (8, 128)-tiled VMEM footprint of a 2-D array.
    return _round_up(max(rows, 1), 8) * _round_up(max(cols, 1), 128) * itemsize


def _choose_batch_tile(batch, batch_tile):
    """Pick (TB, Bp): TB multiple of 8, minimal padding, >=2 tiles if possible."""
    b8 = _round_up(max(batch, 1), 8)
    n_tiles = max(_cdiv(b8, batch_tile), 1)
    # Prefer >= 2 grid steps so the "parallel" batch axis can shard across the
    # two TensorCores of a v7x chip (neutral on single-TC v5e / v6e).
    if n_tiles == 1 and b8 >= 16:
        n_tiles = 2
    tb = _round_up(_cdiv(b8, n_tiles), 8)
    bp = _round_up(b8, tb)
    return tb, bp


# ----------------------------- Pallas kernels --------------------------------


def _vmem_gather_kernel(idx_ref, tab_ref, out_ref, *, tb, nf, d):
    # idx_ref : SMEM (Bp*F,) int32  -- scalar-prefetched flattened row indices
    # tab_ref : VMEM (V, D)         -- whole table, resident & single-buffered
    # out_ref : VMEM (TB, FD_pad)   -- lane-dense output slab for this tile
    base = pl.program_id(0) * (tb * nf)
    out_ref[...] = jnp.zeros_like(out_ref)  # padding lanes / padded rows stay 0

    def row_body(r, carry):
        for f in range(nf):  # F is small & static -> unrolled, static lane slice
            idx = idx_ref[base + r * nf + f]
            out_ref[pl.ds(r, 1), f * d:(f + 1) * d] = tab_ref[pl.ds(idx, 1), :]
        return carry

    lax.fori_loop(0, tb, row_body, 0)


def _hbm_gather_kernel(idx_ref, tab_hbm, out_ref, rowbuf, sems, *, tb, nf, d, nbuf):
    # idx_ref : SMEM (Bp*F,) int32   -- scalar-prefetched flattened row indices
    # tab_hbm : HBM  (V, D)          -- table left in HBM (memory_space=pl.ANY)
    # out_ref : VMEM (TB, FD_pad)
    # rowbuf  : VMEM (nbuf, 1, D)    -- multi-buffered row landing pad
    # sems    : DMA semaphores (nbuf,)
    # TODO(synk): rows are only D*itemsize bytes (64 B here); coalesce multiple
    # rows per DMA descriptor (bucket/sort indices) for better DMA efficiency.
    base = pl.program_id(0) * (tb * nf)
    n_rows = tb * nf
    out_ref[...] = jnp.zeros_like(out_ref)

    def start_fetch(j):
        slot = j % nbuf
        idx = idx_ref[base + j]
        pltpu.make_async_copy(tab_hbm.at[pl.ds(idx, 1), :],
                              rowbuf.at[slot], sems.at[slot]).start()

    # Prime the DMA pipeline.
    for j in range(min(nbuf, n_rows)):
        start_fetch(j)

    def row_body(r, carry):
        for f in range(nf):
            j = r * nf + f
            slot = j % nbuf
            # src arg only sizes the wait; the (dst, sem) pair identifies it.
            pltpu.make_async_copy(tab_hbm.at[pl.ds(0, 1), :],
                                  rowbuf.at[slot], sems.at[slot]).wait()
            out_ref[pl.ds(r, 1), f * d:(f + 1) * d] = rowbuf[slot]

            @pl.when(j + nbuf < n_rows)
            def _():
                start_fetch(j + nbuf)
        return carry

    lax.fori_loop(0, tb, row_body, 0)


# ------------------------------- Wrapper --------------------------------------


def embedding_lookup(table, indices, *, batch_tile=256, force_hbm=False):
    """Gather rows of `table` (V, D) at `indices` (B, F) -> (B, F * D)."""
    table = jnp.asarray(table)
    indices = jnp.asarray(indices, jnp.int32)
    B, F = indices.shape
    V, D = table.shape
    itemsize = table.dtype.itemsize

    FD = F * D
    FD_pad = _round_up(FD, 128)                 # lane-dense output blocks
    TB, Bp = _choose_batch_tile(B, batch_tile)

    # Clamp (jnp.take semantics); also keeps dynamic slices / DMAs in bounds.
    indices = jnp.clip(indices, 0, V - 1)
    if Bp != B:
        indices = jnp.pad(indices, ((0, Bp - B), (0, 0)))  # row 0 is valid
    idx_flat = indices.reshape(Bp * F)
    # TODO(synk): for very large Bp*F the flattened SMEM index array may exceed
    # SMEM; chunk the batch at the wrapper level in that case.

    grid = (Bp // TB,)
    out_spec = pl.BlockSpec((TB, FD_pad), lambda i, idx: (i, 0))
    out_shape = jax.ShapeDtypeStruct((Bp, FD_pad), table.dtype)
    out_block_bytes = _padded_vmem_bytes(TB, FD_pad, itemsize)
    # Real lane-padded footprint of the (V, D) table in VMEM (D<128 inflates it).
    # TODO(synk): pack 8 rows per 128-lane row to cut this ~8x (needs a
    # dynamic-lane-offset gather).
    table_vmem_bytes = _padded_vmem_bytes(V, D, itemsize)

    use_vmem_table = (not force_hbm) and table_vmem_bytes <= 8 * 1024 * 1024

    if use_vmem_table:
        kernel = functools.partial(_vmem_gather_kernel, tb=TB, nf=F, d=D)
        grid_spec = pltpu.PrefetchScalarGridSpec(
            num_scalar_prefetch=1,
            grid=grid,
            # Whole table as a VMEM-resident operand: copied once, single-buffered.
            in_specs=[pl.BlockSpec(memory_space=pltpu.MemorySpace.VMEM)],
            out_specs=out_spec,
        )
        vmem_need = table_vmem_bytes + 2 * out_block_bytes + (4 << 20)
        bytes_accessed = (V * D * itemsize            # table copied to VMEM once
                          + Bp * F * 4                # indices
                          + Bp * FD_pad * itemsize)   # output
    else:
        NBUF = 8
        kernel = functools.partial(_hbm_gather_kernel, tb=TB, nf=F, d=D, nbuf=NBUF)
        grid_spec = pltpu.PrefetchScalarGridSpec(
            num_scalar_prefetch=1,
            grid=grid,
            in_specs=[pl.BlockSpec(memory_space=pl.ANY)],   # table stays in HBM
            out_specs=out_spec,
            scratch_shapes=[
                pltpu.VMEM((NBUF, 1, D), table.dtype),
                pltpu.SemaphoreType.DMA((NBUF,)),
            ],
        )
        vmem_need = (2 * out_block_bytes
                     + NBUF * _padded_vmem_bytes(1, D, itemsize) + (4 << 20))
        bytes_accessed = (Bp * F * D * itemsize       # only the gathered rows
                          + Bp * F * 4
                          + Bp * FD_pad * itemsize)

    out = pl.pallas_call(
        kernel,
        out_shape=out_shape,
        grid_spec=grid_spec,
        compiler_params=pltpu.CompilerParams(
            dimension_semantics=("parallel",),
            vmem_limit_bytes=int(min(max(vmem_need, 16 << 20), 32 << 20))),
        cost_estimate=pl.CostEstimate(
            flops=0, transcendentals=0, bytes_accessed=int(bytes_accessed)),
    )(idx_flat, table)
    return out[:B, :FD]


# --------------------------- Feature / layer glue ----------------------------


class SparseFeature:
    def __init__(self, name, vocab_size, embed_dim=16, shared_with=None,
                 padding_idx=None):
        self.name = name
        self.vocab_size = vocab_size
        self.embed_dim = embed_dim
        self.shared_with = shared_with
        self.padding_idx = padding_idx


class EmbeddingLayer:
    """JAX/Pallas port of the PyTorch EmbeddingLayer (sparse features only).

    All per-feature embedding tables are concatenated into one (sum_vocab, D)
    table; per-feature row offsets turn the per-feature index into a global row
    index so a single Pallas gather kernel serves all features.
    """

    def __init__(self, features, key):
        self.features = features
        self.table_offset = {}
        self.table_rows = {}
        tables = []
        offset = 0
        owners = [f for f in features if f.shared_with is None]
        keys = jax.random.split(key, max(len(owners), 1))
        for f, k in zip(owners, keys):
            # torch.nn.Embedding default init: N(0, 1)
            tbl = jax.random.normal(k, (int(f.vocab_size), f.embed_dim),
                                    dtype=jnp.float32)
            if f.padding_idx is not None:
                # torch.nn.Embedding zero-initializes the padding_idx row.
                # TODO(synk): padding_idx gradient freezing not represented
                # (forward-only port).
                tbl = tbl.at[int(f.padding_idx)].set(0.0)
            self.table_offset[f.name] = offset
            self.table_rows[f.name] = int(f.vocab_size)
            tables.append(tbl)
            offset += int(f.vocab_size)
        for f in features:
            if f.shared_with is not None:
                self.table_offset[f.name] = self.table_offset[f.shared_with]
                self.table_rows[f.name] = self.table_rows[f.shared_with]
        self.big_table = jnp.concatenate(tables, axis=0)  # (sum_vocab, D)
        self.embed_dim = features[0].embed_dim

    def __call__(self, x, features, squeeze_dim=False, force_hbm=False):
        cols = []
        for fea in features:
            if not isinstance(fea, SparseFeature):
                raise ValueError("expected SparseFeatures in feature list")
            idx = jnp.asarray(x[fea.name], jnp.int32)
            idx = jnp.clip(idx, 0, self.table_rows[fea.name] - 1)
            cols.append(idx + self.table_offset[fea.name])
        if len(cols) == 0:
            raise ValueError("The input features can not be empty")
        indices = jnp.stack(cols, axis=1)                       # (B, F) int32
        flat = embedding_lookup(self.big_table, indices,
                                force_hbm=force_hbm)            # (B, F*D)
        if squeeze_dim:
            return flat
        return flat.reshape(flat.shape[0], len(cols), self.embed_dim)


# --------------------------------- main ---------------------------------------

if __name__ == "__main__":
    key = jax.random.PRNGKey(0)
    k_param, k_idx = jax.random.split(key)

    embed_dim = 16
    features = [
        SparseFeature("user_id", vocab_size=10, embed_dim=embed_dim),
        SparseFeature("item_id", vocab_size=20, embed_dim=embed_dim, padding_idx=0),
        SparseFeature("cate_id", vocab_size=30, embed_dim=embed_dim),
    ]
    layer = EmbeddingLayer(features, k_param)

    def run_case(batch, force_hbm):
        ks = jax.random.split(jax.random.fold_in(k_idx, batch), len(features))
        x = {f.name: jax.random.randint(k, (batch,), 0, f.vocab_size,
                                        dtype=jnp.int32)
             for f, k in zip(features, ks)}
        out = layer(x, features, squeeze_dim=False, force_hbm=force_hbm)
        out_flat = layer(x, features, squeeze_dim=True, force_hbm=force_hbm)
        jax.block_until_ready(out)
        jax.block_until_ready(out_flat)

        idx_cols = jnp.stack(
            [jnp.asarray(x[f.name], jnp.int32) + layer.table_offset[f.name]
             for f in features], axis=1)
        ref = jnp.take(layer.big_table, idx_cols, axis=0)       # (B, F, D)
        assert out.shape == (batch, len(features), embed_dim)
        assert out_flat.shape == (batch, len(features) * embed_dim)
        np.testing.assert_allclose(np.asarray(out), np.asarray(ref),
                                   rtol=0, atol=1e-6)
        np.testing.assert_allclose(np.asarray(out_flat),
                                   np.asarray(ref).reshape(batch, -1),
                                   rtol=0, atol=1e-6)

    run_case(batch=8, force_hbm=False)    # single tile, VMEM-resident table
    run_case(batch=20, force_hbm=False)   # padded batch, 2 grid steps
    run_case(batch=8, force_hbm=True)     # HBM-resident table, manual DMA gather

    print("KERNEL_OK")
</pallas_src>

<mosaic_0001>
module attributes {stable_mosaic.version = 11 : i64} {
  func.func @_vmem_gather_kernel(%arg0: i32, %arg1: memref<24xi32, #tpu.memory_space<smem>>, %arg2: memref<60x16xf32, #tpu.memory_space<vmem>>, %arg3: memref<8x128xf32, #tpu.memory_space<vmem>>) attributes {dimension_semantics = [#tpu.dimension_semantics<parallel>], iteration_bounds = array<i64: 1>, scalar_prefetch = 1 : i64, scratch_operands = 0 : i64, tpu.core_type = #tpu.core_type<tc>, window_params = [{pipeline_mode = #tpu.pipeline_mode<synchronous>, transform_indices = @transform_0, window_bounds = array<i64: 60, 16>}, {transform_indices = @transform_1, window_bounds = array<i64: 8, 128>}]} {
    %c24_i32 = arith.constant 24 : i32
    %0 = arith.muli %arg0, %c24_i32 : i32
    %cst = arith.constant 0.000000e+00 : f32
    %1 = vector.broadcast %cst : f32 to vector<8x128xf32>
    %c0 = arith.constant 0 : index
    %c0_0 = arith.constant 0 : index
    %2 = vector.load %arg3[%c0, %c0_0] : memref<8x128xf32, #tpu.memory_space<vmem>>, vector<8x128xf32>
    tpu.vector_store %arg3[%c0, %c0_0], %1 {strides = array<i32>} : memref<8x128xf32, #tpu.memory_space<vmem>>, vector<8x128xf32>,
    %c0_i32 = arith.constant 0 : i32
    %c8_i32 = arith.constant 8 : i32
    %3 = arith.addi %c0_i32, %c8_i32 : i32
    %c1_i32 = arith.constant 1 : i32
    scf.for %arg4 = %c0_i32 to %3 step %c1_i32  : i32 {
      %c3_i32 = arith.constant 3 : i32
      %4 = arith.muli %arg4, %c3_i32 : i32
      %5 = arith.addi %0, %4 : i32
      %c0_i32_2 = arith.constant 0 : i32
      %6 = arith.addi %5, %c0_i32_2 : i32
      %7 = arith.index_cast %6 : i32 to index
      %8 = memref.load %arg1[%7] : memref<24xi32, #tpu.memory_space<smem>>
      %9 = arith.index_cast %8 : i32 to index
      %c0_3 = arith.constant 0 : index
      %10 = vector.load %arg2[%9, %c0_3] : memref<60x16xf32, #tpu.memory_space<vmem>>, vector<1x16xf32>
      %11 = arith.index_cast %arg4 : i32 to index
      %c0_4 = arith.constant 0 : index
      %12 = vector.load %arg3[%11, %c0_4] : memref<8x128xf32, #tpu.memory_space<vmem>>, vector<1x16xf32>
      tpu.vector_store %arg3[%11, %c0_4], %10 {strides = array<i32>} : memref<8x128xf32, #tpu.memory_space<vmem>>, vector<1x16xf32>,
      %c3_i32_5 = arith.constant 3 : i32
      %13 = arith.muli %arg4, %c3_i32_5 : i32
      %14 = arith.addi %0, %13 : i32
      %c1_i32_6 = arith.constant 1 : i32
      %15 = arith.addi %14, %c1_i32_6 : i32
      %16 = arith.index_cast %15 : i32 to index
      %17 = memref.load %arg1[%16] : memref<24xi32, #tpu.memory_space<smem>>
      %18 = arith.index_cast %17 : i32 to index
      %c0_7 = arith.constant 0 : index
      %19 = vector.load %arg2[%18, %c0_7] : memref<60x16xf32, #tpu.memory_space<vmem>>, vector<1x16xf32>
      %20 = arith.index_cast %arg4 : i32 to index
      %c16 = arith.constant 16 : index
      %21 = vector.load %arg3[%20, %c16] : memref<8x128xf32, #tpu.memory_space<vmem>>, vector<1x16xf32>
      tpu.vector_store %arg3[%20, %c16], %19 {strides = array<i32>} : memref<8x128xf32, #tpu.memory_space<vmem>>, vector<1x16xf32>,
      %c3_i32_8 = arith.constant 3 : i32
      %22 = arith.muli %arg4, %c3_i32_8 : i32
      %23 = arith.addi %0, %22 : i32
      %c2_i32 = arith.constant 2 : i32
      %24 = arith.addi %23, %c2_i32 : i32
      %25 = arith.index_cast %24 : i32 to index
      %26 = memref.load %arg1[%25] : memref<24xi32, #tpu.memory_space<smem>>
      %27 = arith.index_cast %26 : i32 to index
      %c0_9 = arith.constant 0 : index
      %28 = vector.load %arg2[%27, %c0_9] : memref<60x16xf32, #tpu.memory_space<vmem>>, vector<1x16xf32>
      %29 = arith.index_cast %arg4 : i32 to index
      %c32 = arith.constant 32 : index
      %30 = vector.load %arg3[%29, %c32] : memref<8x128xf32, #tpu.memory_space<vmem>>, vector<1x16xf32>
      tpu.vector_store %arg3[%29, %c32], %28 {strides = array<i32>} : memref<8x128xf32, #tpu.memory_space<vmem>>, vector<1x16xf32>,
    }
    %c8_i32_1 = arith.constant 8 : i32
    return
  }
  func.func @transform_0(%arg0: i32, %arg1: memref<24xi32, #tpu.memory_space<smem>>) -> (i32, i32) {
    %c0_i32 = arith.constant 0 : i32
    %c0_i32_0 = arith.constant 0 : i32
    %c0_i32_1 = arith.constant 0 : i32
    return %c0_i32, %c0_i32_0 : i32, i32
  }
  func.func @transform_1(%arg0: i32, %arg1: memref<24xi32, #tpu.memory_space<smem>>) -> (i32, i32) {
    %c0_i32 = arith.constant 0 : i32
    %c0_i32_0 = arith.constant 0 : i32
    return %arg0, %c0_i32 : i32, i32
  }
}

</mosaic_0001>

<llo_original>
// kernel: tpu_custom_call.1
$region0: #{tpu_custom_call.1}
  #allocation0 [shape = 'u32[]', space=smem, size = 0x4, offset = 0x4, fixed_abs, tag = 'smem constant byte address 0x4 - core index']
  #allocation1 [shape = 'u32[72,128]{1,0:T(1,128)}', space=vmem, size = 0x9000, scoped, tag = 'internal scratch']
  #allocation2 [shape = 's32[1]{0}', space=sflag, size = 0x4, scoped, tag = 'scoped memory for tpu_custom_call.1']
  #allocation3 [shape = 'u8[512]{0}', space=smem, size = 0x200, scoped, tag = 'prefetched SMEM operand 0']
  %s0 = inlined_call_operand.vmem [shape: s32[24], index: 0, kind: input, shape index: {}]
  %s1 = inlined_call_operand.vmem [shape: f32[60,16], index: 1, kind: input, shape index: {}]
  %s2 = inlined_call_operand.hbm [shape: f32[8,128], index: 2, kind: output, shape index: {}]
  %s3 = sld [smem:[#allocation0]]
  $region21: #{tpu_custom_call.1} parent=0
    _
  %s5 = ssub.s32 1, %s3
  %s6 = scalar_select 0, %s5, %s3
  %s8 = sshll.u32 %s0, 4
  %s9 = int_to_ptr.vmem [resolvable:$true] %s8
  %11 = dma.vmem_to_smem %s9, 16, [#allocation3], [#allocation2]
  %13 = dma.done [#allocation2], 16
  %14 = sfence
  $region1: #{tpu_custom_call.1} parent=0
    #allocation4 [shape = 'u8[4096]{0}', space=vmem, size = 0x1000, scoped, tag = 'output window, operand 0, single buffered']
    #allocation5 [shape = 's32[1]{0}', space=sflag, size = 0x4, scoped, tag = 'scoped memory for tpu_custom_call.1']
    %15 = vsyncpa [#allocation5], 0
    // Predicated region
    $region2: #{tpu_custom_call.1} parent=1 // pred_check
      _
    $region3: #{tpu_custom_call.1} parent=1 // pred_check_branch
      %17 = sbr.rel (0) target = $region5
    $region4: #{tpu_custom_call.1} parent=1 // pred_region
      _
    $region5: #{tpu_custom_call.1} parent=1 // pred_fallthru
      _
    %s18 = smul.u32 0, 24
    %19 = vst [vmem:[#allocation4] sm:$0xff] 0.0
    loop: start=0, step=1, limit=8
    $region6: #{tpu_custom_call.1} parent=1 // loop_pre_header
      _
    $region7: #{tpu_custom_call.1} parent=1 // loop_header
      %s21 = sphi 0, %s25
      %p22 = scmp.ge.s32.totalorder %s21, 8
    $region8: #{tpu_custom_call.1} parent=1 // loop_header_branch
      %24 = sbr.rel (%p22) target = $region12
    $region9: #{tpu_custom_call.1} parent=1 // loop_body
      %s26 = smul.u32 %s21, 3
      %s27 = sadd.s32 %s18, %s26
      %s28 = sld [smem:[#allocation3 + %s27]]
      %s29 = scalar_lea.vmem %s1, %s28
      %v30 = vld [vmem:[%s29] sm:$0x1]
      %s31 = scalar_lea.vmem [#allocation4], %s21
      %vm32 = vcmask 122880
      %33 = vst.msk [vmem:[%s31] sm:$0x1] %vm32, %v30
      %s34 = sadd.s32 %s27, 1
      %s35 = sld [smem:[#allocation3 + %s34]]
      %s36 = scalar_lea.vmem %s1, %s35
      %v37 = vld [vmem:[%s36] sm:$0x1]
      %39 = vrot.lane.b32.xlu0 %v37, 16
      %v40 = vpop.permute.xlu0 %39
      %vm42 = vcmask 254080
      %43 = vst.msk [vmem:[%s31] sm:$0x1] %vm42, %v40
      %s44 = sadd.s32 %s27, 2
      %s45 = sld [smem:[#allocation3 + %s44]]
      %s46 = scalar_lea.vmem %s1, %s45
      %v47 = vld [vmem:[%s46] sm:$0x1]
      %49 = vrot.lane.b32.xlu0 %v47, 32
      %v50 = vpop.permute.xlu0 %49
      %vm52 = vcmask 385280
      %53 = vst.msk [vmem:[%s31] sm:$0x1] %vm52, %v50
    $region10: #{tpu_custom_call.1} parent=1 // loop_footer
      %s25 = sadd.s32 1, %s21
    $region11: #{tpu_custom_call.1} parent=1 // loop_footer_branch
      %20 = sbr.rel target = $region7
    $region12: #{tpu_custom_call.1} parent=1 // loop_exit
      _
    // Predicated region
    $region13: #{tpu_custom_call.1} parent=1 // pred_check
      _
    $region14: #{tpu_custom_call.1} parent=1 // pred_check_branch
      %55 = sbr.rel (0) target = $region16
    $region15: #{tpu_custom_call.1} parent=1 // pred_region
      %57 = vsyncadd [#allocation5], 0
      %s59 = sshll.u32 [#allocation4], 4
      %s60 = int_to_ptr.vmem [resolvable:$true] %s59
      %s61 = sshll.u32 %s2, 4
      %s62 = int_to_ptr.hbm [resolvable:$true] %s61
      %64 = dma.vmem_to_hbm [thread:$0]  %s60, 128, %s62, [#allocation5]
    $region16: #{tpu_custom_call.1} parent=1 // pred_fallthru
      _
    // Predicated region
    $region17: #{tpu_custom_call.1} parent=1 // pred_check
      _
    $region18: #{tpu_custom_call.1} parent=1 // pred_check_branch
      %66 = sbr.rel (0) target = $region20
    $region19: #{tpu_custom_call.1} parent=1 // pred_region
      %68 = dma.done [#allocation5], 128
    $region20: #{tpu_custom_call.1} parent=1 // pred_fallthru
      _
    %69 = vsyncpa [#allocation5], 1

</llo_original>
